<compile_context>
chip_gen: v7x
topology: tpu7x:2x2x1
jax: 0.10.0
libtpu: 0.0.40
codegen_flags: <defaults>
</compile_context>

<pallas_src>
import functools
import math

import jax
import jax.numpy as jnp
from jax.experimental import pallas as pl
from jax.experimental.pallas import tpu as pltpu

DEFAULT_EPS = 1e-06  # module default


def _gem_kernel_static_p(x_ref, o_ref, *, p_int, inv_p, log_inv_hw, eps, clamp):
    # x_ref : VMEM (TM, HW) native dtype; o_ref : VMEM (TM, 1) out dtype.
    x = x_ref[...].astype(jnp.float32)
    if clamp:
        x = jnp.maximum(x, eps)
    # x ** p_int via repeated multiply (VPU) -- avoids 2 EUP transcendentals
    # per element, keeping the kernel HBM-bound on v7x.
    xp = x
    for _ in range(p_int - 1):
        xp = xp * x
    s = jnp.sum(xp, axis=-1, keepdims=True)
    # (s / HW) ** (1/p)  ==  exp((log(s) + log(1/HW)) * (1/p))   (per-row only)
    o_ref[...] = jnp.exp((jnp.log(s) + log_inv_hw) * inv_p).astype(o_ref.dtype)


def _gem_kernel_dyn_p(p_ref, x_ref, o_ref, *, log_inv_hw, eps, clamp):
    # p_ref : SMEM (1,) f32 learnable exponent (traced / non-integer case).
    p = p_ref[0]
    x = x_ref[...].astype(jnp.float32)
    if clamp:
        x = jnp.maximum(x, eps)
    # TODO(synk): with clamp=False and negative inputs, exp(p*log(x)) is NaN;
    # torch.pow with an integer-valued float exponent would return a signed
    # value. The clamped (default) path matches exactly.
    xp = jnp.exp(p * jnp.log(x))
    s = jnp.sum(xp, axis=-1, keepdims=True)
    o_ref[...] = jnp.exp((jnp.log(s) + log_inv_hw) * (1.0 / p)).astype(o_ref.dtype)


def _pick_tile_rows(nc: int, hw: int, elem_bytes: int) -> int:
    """Row-tile size: multiple of 8, ~4 MiB per input tile (double-buffered)."""
    target_bytes = 4 << 20
    tm = target_bytes // max(1, hw * elem_bytes)
    tm = max(8, (tm // 8) * 8)
    if tm >= nc:
        return nc  # single full-extent block (always a legal block shape)
    return int(tm)


def gem_pool(x: jax.Array, p, eps: float = DEFAULT_EPS, clamp: bool = True) -> jax.Array:
    """Generalized mean pooling: (N, C, H, W) -> (N, C)."""
    n, c, h, w = x.shape
    nc, hw = n * c, h * w
    x2d = x.reshape(nc, hw)  # native dtype: no wrapper-side f32 upcast
    elem_bytes = x2d.dtype.itemsize
    out_dtype = x.dtype

    tm = _pick_tile_rows(nc, hw, elem_bytes)
    grid = (pl.cdiv(nc, tm),)
    log_inv_hw = float(-math.log(hw))

    compiler_params = pltpu.CompilerParams(
        dimension_semantics=("parallel",),      # shard row tiles across TCs (v7x)
        vmem_limit_bytes=32 * 1024 * 1024,      # safe on v5e/v6e/v7x; tiles are ~4 MiB
    )

    # Resolve a static value for p when it is concrete (e.g. the deterministic
    # Parameter init). Under jit/trace this falls back to the dynamic path.
    p_static = None
    try:
        p_static = float(jnp.asarray(p).reshape(()))
    except Exception:
        p_static = None

    x_spec = pl.BlockSpec((tm, hw), lambda i: (i, 0))
    o_spec = pl.BlockSpec((tm, 1), lambda i: (i, 0))
    out_shape = jax.ShapeDtypeStruct((nc, 1), out_dtype)

    use_int_pow = (
        p_static is not None
        and abs(p_static - round(p_static)) < 1e-6
        and 1 <= round(p_static) <= 8
    )

    if use_int_pow:
        p_int = int(round(p_static))
        kernel = functools.partial(
            _gem_kernel_static_p,
            p_int=p_int,
            inv_p=1.0 / float(p_int),
            log_inv_hw=log_inv_hw,
            eps=float(eps),
            clamp=bool(clamp),
        )
        cost = pl.CostEstimate(
            flops=int(nc * hw * (p_int + 1)),
            transcendentals=int(2 * nc),
            bytes_accessed=int(nc * hw * elem_bytes + nc * out_dtype.itemsize),
        )
        out = pl.pallas_call(
            kernel,
            out_shape=out_shape,
            grid=grid,
            in_specs=[x_spec],
            out_specs=o_spec,
            compiler_params=compiler_params,
            cost_estimate=cost,
        )(x2d)
    else:
        kernel = functools.partial(
            _gem_kernel_dyn_p,
            log_inv_hw=log_inv_hw,
            eps=float(eps),
            clamp=bool(clamp),
        )
        cost = pl.CostEstimate(
            flops=int(3 * nc * hw),
            transcendentals=int(2 * nc * hw + 2 * nc),
            bytes_accessed=int(nc * hw * elem_bytes + nc * out_dtype.itemsize),
        )
        p_arr = jnp.asarray(p, jnp.float32).reshape((1,))
        out = pl.pallas_call(
            kernel,
            out_shape=out_shape,
            grid=grid,
            in_specs=[
                pl.BlockSpec(memory_space=pltpu.SMEM),  # p (scalar, full array)
                x_spec,
            ],
            out_specs=o_spec,
            compiler_params=compiler_params,
            cost_estimate=cost,
        )(p_arr, x2d)

    # TODO(synk): if upstream features become NHWC, a channel-on-lanes layout
    # (N*H*W, C) with a grid-over-HW accumulator would improve lane utilization
    # for 7x7 maps; skipped here to avoid an XLA transpose of NCHW inputs.
    return out.reshape(n, c)


class GeneralizedMeanPooling:
    """JAX/Pallas port of the PyTorch GeneralizedMeanPooling neck."""

    def __init__(self, p: float = 3.0, eps: float = DEFAULT_EPS, clamp: bool = True):
        assert p >= 1, "'p' must be a value greater then 1"
        # Parameter(torch.ones(1) * p) -> deterministic init
        self.p = jnp.ones((1,), jnp.float32) * p
        self.eps = eps
        self.clamp = clamp

    def __call__(self, inputs):
        if isinstance(inputs, tuple):
            return tuple(
                gem_pool(x, self.p, eps=self.eps, clamp=self.clamp) for x in inputs
            )
        return gem_pool(inputs, self.p, eps=self.eps, clamp=self.clamp)


if __name__ == "__main__":
    key = jax.random.PRNGKey(0)
    # Small NCHW input consistent with the module's conv-feature usage.
    x = jax.random.normal(key, (2, 4, 16, 16), dtype=jnp.float32)

    neck = GeneralizedMeanPooling(p=3.0, eps=DEFAULT_EPS, clamp=True)

    # Default (static integer p) path.
    out = jax.block_until_ready(neck(x))
    xc = jnp.maximum(x, DEFAULT_EPS)
    ref = jnp.mean(xc ** 3.0, axis=(2, 3)) ** (1.0 / 3.0)
    assert out.shape == (2, 4)
    assert jnp.allclose(out, ref, rtol=1e-4, atol=1e-5)

    # Tuple-input path (module supports tuple of feature maps).
    outs = jax.block_until_ready(neck((x, x * 0.5)))
    assert isinstance(outs, tuple) and outs[0].shape == (2, 4) and outs[1].shape == (2, 4)

    # Non-integer p exercises the dynamic (SMEM exponent) kernel.
    out_gen = jax.block_until_ready(gem_pool(x, jnp.asarray(3.5, jnp.float32)))
    ref_gen = jnp.mean(xc ** 3.5, axis=(2, 3)) ** (1.0 / 3.5)
    assert jnp.allclose(out_gen, ref_gen, rtol=1e-4, atol=1e-5)

    # bf16 input streams half the HBM bytes; accumulation stays f32 in-kernel.
    out_bf16 = jax.block_until_ready(neck(x.astype(jnp.bfloat16)))
    assert out_bf16.shape == (2, 4) and out_bf16.dtype == jnp.bfloat16
    assert jnp.allclose(out_bf16.astype(jnp.float32), ref, rtol=2e-2, atol=2e-2)

    print("KERNEL_OK")
</pallas_src>

<mosaic_0001>
module attributes {stable_mosaic.version = 11 : i64} {
  func.func @_gem_kernel_static_p(%arg0: i32, %arg1: memref<8x256xf32, #tpu.memory_space<vmem>>, %arg2: memref<8x1xf32, #tpu.memory_space<vmem>>) attributes {dimension_semantics = [#tpu.dimension_semantics<parallel>], iteration_bounds = array<i64: 1>, scalar_prefetch = 0 : i64, scratch_operands = 0 : i64, tpu.core_type = #tpu.core_type<tc>, window_params = [{transform_indices = @transform_0, window_bounds = array<i64: 8, 256>}, {transform_indices = @transform_1, window_bounds = array<i64: 8, 1>}]} {
    %c0 = arith.constant 0 : index
    %c0_0 = arith.constant 0 : index
    %0 = vector.load %arg1[%c0, %c0_0] : memref<8x256xf32, #tpu.memory_space<vmem>>, vector<8x256xf32>
    %cst = arith.constant 9.99999997E-7 : f32
    %1 = vector.broadcast %cst : f32 to vector<8x256xf32>
    %2 = arith.maximumf %0, %1 : vector<8x256xf32>
    %3 = arith.mulf %2, %2 : vector<8x256xf32>
    %4 = arith.mulf %3, %2 : vector<8x256xf32>
    %cst_1 = arith.constant dense<0.000000e+00> : vector<8xf32>
    %5 = vector.multi_reduction <add>, %4, %cst_1 [1] : vector<8x256xf32> to vector<8xf32>
    %6 = vector.shape_cast %5 : vector<8xf32> to vector<8x1xf32>
    %7 = math.log %6 : vector<8x1xf32>
    %cst_2 = arith.constant -5.54517746 : f32
    %8 = vector.broadcast %cst_2 : f32 to vector<8x1xf32>
    %9 = arith.addf %7, %8 : vector<8x1xf32>
    %cst_3 = arith.constant 0.333333343 : f32
    %10 = vector.broadcast %cst_3 : f32 to vector<8x1xf32>
    %11 = arith.mulf %9, %10 : vector<8x1xf32>
    %12 = math.exp %11 : vector<8x1xf32>
    %c0_4 = arith.constant 0 : index
    %c0_5 = arith.constant 0 : index
    %13 = vector.load %arg2[%c0_4, %c0_5] : memref<8x1xf32, #tpu.memory_space<vmem>>, vector<8x1xf32>
    tpu.vector_store %arg2[%c0_4, %c0_5], %12 {strides = array<i32>} : memref<8x1xf32, #tpu.memory_space<vmem>>, vector<8x1xf32>,
    return
  }
  func.func @transform_0(%arg0: i32) -> (i32, i32) {
    %c0_i32 = arith.constant 0 : i32
    %c0_i32_0 = arith.constant 0 : i32
    return %arg0, %c0_i32 : i32, i32
  }
  func.func @transform_1(%arg0: i32) -> (i32, i32) {
    %c0_i32 = arith.constant 0 : i32
    %c0_i32_0 = arith.constant 0 : i32
    return %arg0, %c0_i32 : i32, i32
  }
}

</mosaic_0001>

<llo_original>
// kernel: tpu_custom_call.1
$region0: #{tpu_custom_call.1}
  #allocation0 [shape = 'u32[]', space=smem, size = 0x4, offset = 0x4, fixed_abs, tag = 'smem constant byte address 0x4 - core index']
  #allocation1 [shape = 'u32[144,128]{1,0:T(1,128)}', space=vmem, size = 0x12000, scoped, tag = 'internal scratch']
  %s0 = inlined_call_operand.hbm [shape: f32[8,256], index: 0, kind: input, shape index: {}]
  %s1 = inlined_call_operand.vmem [shape: f32[8,1], index: 1, kind: output, shape index: {}]
  %s2 = sld [smem:[#allocation0]]
  $region18: #{tpu_custom_call.1} parent=0
    _
  %s4 = ssub.s32 1, %s2
  %s5 = scalar_select 0, %s4, %s2
  $region1: #{tpu_custom_call.1} parent=0
    #allocation2 [shape = 'u8[8192]{0}', space=vmem, size = 0x2000, scoped, tag = 'input window, operand 0, single buffered']
    #allocation3 [shape = 's32[1]{0}', space=sflag, size = 0x4, scoped, tag = 'scoped memory for tpu_custom_call.1']
    %6 = vsyncpa [#allocation3], 0
    // Predicated region
    $region2: #{tpu_custom_call.1} parent=1 // pred_check
      _
    $region3: #{tpu_custom_call.1} parent=1 // pred_check_branch
      %8 = sbr.rel (0) target = $region5
    $region4: #{tpu_custom_call.1} parent=1 // pred_region
      %s10 = ssub.s32 256, 256
      %11 = vsyncadd [#allocation3], %s10
      %s13 = sshll.u32 [#allocation2], 4
      %s14 = int_to_ptr.vmem [resolvable:$true] %s13
      %16 = dma.hbm_to_vmem [thread:$0]  %s0, 256, %s14, [#allocation3]
    $region5: #{tpu_custom_call.1} parent=1 // pred_fallthru
      _
    // Predicated region
    $region6: #{tpu_custom_call.1} parent=1 // pred_check
      _
    $region7: #{tpu_custom_call.1} parent=1 // pred_check_branch
      %18 = sbr.rel (0) target = $region9
    $region8: #{tpu_custom_call.1} parent=1 // pred_region
      %19 = dma.done [#allocation3], 256
    $region9: #{tpu_custom_call.1} parent=1 // pred_fallthru
      _
    %v20 = vld [vmem:[#allocation2] sm:$0xff]
    %v21 = vld [vmem:[#allocation2 + $0x8] sm:$0xff]
    %v22 = vmax.f32 %v20, 1e-06
    %v23 = vmax.f32 %v21, 1e-06
    %v24 = vmul.f32 %v22, %v22
    %v25 = vmul.f32 %v23, %v23
    %v26 = vmul.f32 %v24, %v22
    %v27 = vmul.f32 %v25, %v23
    %v28 = vadd.f32 %v26, %v27
    %29 = vadd.xlane.f32.xlu0 %v28
    %v30 = vpop.xlane.xlu0 %29
    %v31 = vlog2.pop %v30
    %v32 = vmul.f32 %v31, 0.6931472
    %v33 = vadd.f32 %v32, -5.5451775
    %v34 = vmul.f32 %v33, 0.33333334
    %v35 = vmul.f32 %v34, 1.442695
    %v36 = vpow.pop %v35
    %vm37 = vcmask 7168
    %38 = vst.msk [vmem:[%s1] sm:$0xff] %vm37, %v36
    // Predicated region
    $region10: #{tpu_custom_call.1} parent=1 // pred_check
      _
    $region11: #{tpu_custom_call.1} parent=1 // pred_check_branch
      %40 = sbr.rel (0) target = $region13
    $region12: #{tpu_custom_call.1} parent=1 // pred_region
      _
    $region13: #{tpu_custom_call.1} parent=1 // pred_fallthru
      _
    // Predicated region
    $region14: #{tpu_custom_call.1} parent=1 // pred_check
      _
    $region15: #{tpu_custom_call.1} parent=1 // pred_check_branch
      %42 = sbr.rel (0) target = $region17
    $region16: #{tpu_custom_call.1} parent=1 // pred_region
      _
    $region17: #{tpu_custom_call.1} parent=1 // pred_fallthru
      _
    %43 = vsyncpa [#allocation3], 1

</llo_original>
